<compile_context>
chip_gen: v6e
topology: v6e:2x2x1
jax: 0.10.0
libtpu: 0.0.40
codegen_flags: <defaults>
</compile_context>

<pallas_src>
import functools

import jax
import jax.numpy as jnp
from jax import lax
from jax.experimental import pallas as pl
from jax.experimental.pallas import tpu as pltpu


# ----------------------------- fused Pallas kernel --------------------------

def _sum_all(v):
    # Global reduction kept as a (1,1) tile (lane -> sublane reduce).
    return jnp.sum(jnp.sum(v, axis=1, keepdims=True), axis=0, keepdims=True)


def _tikhonov_cg_kernel(*refs, n_iter, eps, use_gram, gram_is_input):
    if gram_is_input:
        x_ref, x0_ref, h_ref, g_ref, mu_ref, out_ref = refs
    else:
        x_ref, x0_ref, h_ref, mu_ref, out_ref = refs
        g_ref = None

    h = h_ref[...]                                   # (Mp, Np) f32, VMEM
    mu = mu_ref[0]                                   # scalar, SMEM

    if use_gram:
        # A(c) = c @ G + mu*c ; G either cached by the caller (free) or built
        # once here when the M^2*N build is cheaper than 2*n_iter direct
        # applications (small M / large BC).
        g = g_ref[...] if gram_is_input else lax.dot_general(
            h, h, (((1,), (1,)), ((), ())), preferred_element_type=jnp.float32)

        def apply_A(c):
            return jnp.dot(c, g, preferred_element_type=jnp.float32) + mu * c
    else:
        # Direct operator, same rounding order as the torch reference:
        # A(c) = Forward_op(adjoint(c)) + mu*c = (c @ H) @ H.T + mu*c.
        def apply_A(c):
            ch = jnp.dot(c, h, preferred_element_type=jnp.float32)   # (BCp,Np)
            return lax.dot_general(ch, h, (((1,), (1,)), ((), ())),
                                   preferred_element_type=jnp.float32) + mu * c

    # Outer residual: y = x - Forward_op(x_0) = x - x_0 @ H.T
    y = x_ref[...] - lax.dot_general(
        x0_ref[...], h, (((1,), (1,)), ((), ())),
        preferred_element_type=jnp.float32)                          # (BCp,Mp)

    # CG init. z = 0 so A(z) = 0 and r = c = y (reference's A(0) elided).
    z = jnp.zeros_like(y)
    r = y
    c = y
    kold = _sum_all(y * y)                                           # (1,1)
    a = jnp.ones((1, 1), jnp.float32)

    # n_iter is static -> fully unrolled so adjacent iterations' short
    # matmuls / XLU reductions can interleave.
    for _ in range(n_iter):
        run = a > eps                                # (1,1) gate == `if a > eps`
        Ac = apply_A(c)
        cAc = _sum_all(c * Ac)
        # Scalar gate instead of full-tile selects: a_eff == 0 on the
        # gated-off path makes the z / r updates identity FMAs, so the final
        # z (and hence the output) matches the reference exactly.
        a_eff = jnp.where(run, kold / cAc, 0.0)
        z = z + a_eff * c
        r = r - a_eff * Ac
        k = _sum_all(r * r)
        b_eff = jnp.where(run, k / kold, 0.0)
        c = r + b_eff * c
        kold = jnp.where(run, k, kold)
        a = jnp.where(run, a_eff, a)

    # out = x_0 + adjoint(z) = x_0 + z @ H
    out_ref[...] = x0_ref[...] + jnp.dot(z, h,
                                         preferred_element_type=jnp.float32)


# ----------------------------- wrapper --------------------------------------

def _round_up(v, m):
    return ((v + m - 1) // m) * m


def _pick_vmem_limit_bytes():
    """~85% of physical VMEM: ~54 MiB on v7x (64 MiB phys), ~108 MiB on
    v5e/v6e (128 MiB phys). Leaves headroom for compiler scratch/semaphores."""
    try:
        cap = int(pltpu.get_tpu_info().vmem_capacity_bytes)
        return min(int(cap * 0.85), 112 * 1024 * 1024)
    except Exception:
        return 48 * 1024 * 1024      # conservative: fits every generation


def tikhonov_cg_forward(x, x_0, h, mu, *, gram=None, n_iter=5, eps=1e-6):
    """Mirrors Tikhonov_cg.forward(x, x_0, FO) with FO = Linear(H).

    gram: optional precomputed H @ H.T.  spyrit's H is a fixed measurement
    matrix, so callers should compute it once and reuse it across forwards.
    """
    bc, M = x.shape
    Mh, N = h.shape
    assert Mh == M, (Mh, M)

    # Pad to lane-dense, (8,128)-aligned shapes.  Zero padding is exact for
    # every matmul and global reduction here (padded rows/cols stay zero).
    BCp = max(_round_up(bc, 8), 8)
    Mp = _round_up(M, 128)
    Np = _round_up(N, 128)

    xp = jnp.zeros((BCp, Mp), jnp.float32).at[:bc, :M].set(x.astype(jnp.float32))
    x0p = jnp.zeros((BCp, Np), jnp.float32).at[:bc, :N].set(x_0.astype(jnp.float32))
    hp = jnp.zeros((Mp, Np), jnp.float32).at[:M, :N].set(h.astype(jnp.float32))
    mu_arr = jnp.asarray(mu, dtype=jnp.float32).reshape((1,))

    gram_is_input = gram is not None
    # Static choice: build G only when it beats 2*n_iter direct applications.
    use_gram = gram_is_input or (Mp <= 2 * n_iter * BCp)

    # grid=(1,) -> nothing to pipeline, so single-buffer every operand
    # (pl.Buffered(1)): halves the VMEM footprint of H / G / x0 / out.
    def spec(shape):
        return pl.BlockSpec(shape, lambda i: (0, 0),
                            pipeline_mode=pl.Buffered(1))

    operands = [xp, x0p, hp]
    in_specs = [spec((BCp, Mp)), spec((BCp, Np)), spec((Mp, Np))]
    if gram_is_input:
        gp = jnp.zeros((Mp, Mp), jnp.float32).at[:M, :M].set(
            gram.astype(jnp.float32))
        operands.append(gp)
        in_specs.append(spec((Mp, Mp)))
    operands.append(mu_arr)
    in_specs.append(pl.BlockSpec(memory_space=pltpu.SMEM))   # mu scalar

    kernel = functools.partial(_tikhonov_cg_kernel, n_iter=n_iter, eps=eps,
                               use_gram=use_gram, gram_is_input=gram_is_input)

    out = pl.pallas_call(
        kernel,
        out_shape=jax.ShapeDtypeStruct((BCp, Np), jnp.float32),
        grid=(1,),
        in_specs=in_specs,
        out_specs=spec((BCp, Np)),
        compiler_params=pltpu.CompilerParams(
            dimension_semantics=("arbitrary",),
            vmem_limit_bytes=_pick_vmem_limit_bytes(),
        ),
    )(*operands)

    return out[:bc, :N]


# ----------------------------- pure-JAX reference ---------------------------

def _reference_forward(x, x_0, h, mu, n_iter=5, eps=1e-6):
    """Straight transcription of the torch module (eager, un-fused)."""
    def A(v):
        return (v @ h) @ h.T + mu[0] * v

    y = x - x_0 @ h.T
    z = jnp.zeros_like(y)
    r = y - A(z)
    c = r
    kold = jnp.sum(r * r)
    a = jnp.float32(1.0)
    for _ in range(n_iter):
        if float(a) > eps:
            Ac = A(c)
            cAc = jnp.sum(c * Ac)
            a = kold / cAc
            z = z + a * c
            r = r - a * Ac
            k = jnp.sum(r * r)
            b = k / kold
            c = r + b * c
            kold = k
    return x_0 + z @ h


# ----------------------------- demo -----------------------------------------

if __name__ == "__main__":
    key = jax.random.PRNGKey(0)
    b, ch = 2, 4                # batch, channels
    M = 32                      # number of measurements
    N = 8 * 8                   # flattened image size
    bc = b * ch

    k1, k2, k3 = jax.random.split(key, 3)
    x = jax.random.normal(k1, (bc, M), dtype=jnp.float32)      # measurements
    x_0 = jax.random.normal(k2, (bc, N), dtype=jnp.float32)    # previous estimate
    H = jax.random.normal(k3, (M, N), dtype=jnp.float32) / jnp.sqrt(N)
    mu = jnp.array([0.1], dtype=jnp.float32)   # nn.Parameter(torch.tensor([0.1]))

    ref = _reference_forward(x, x_0, H, mu, n_iter=5, eps=1e-6)

    # Path 1: no cached Gram -> direct operator application per CG iteration.
    fwd = jax.jit(functools.partial(tikhonov_cg_forward, n_iter=5, eps=1e-6))
    out = fwd(x, x_0, H, mu)
    jax.block_until_ready(out)
    assert out.shape == (bc, N) and out.dtype == jnp.float32
    rel_err = float(jnp.max(jnp.abs(out - ref)) / (jnp.max(jnp.abs(ref)) + 1e-6))
    assert rel_err < 5e-2, f"direct path mismatch vs reference: {rel_err}"

    # Path 2: cached Gram (H is fixed in spyrit -> compute G once, reuse).
    G = H @ H.T
    fwd_g = jax.jit(lambda x_, x0_, h_, mu_, g_: tikhonov_cg_forward(
        x_, x0_, h_, mu_, gram=g_, n_iter=5, eps=1e-6))
    out_g = fwd_g(x, x_0, H, mu, G)
    jax.block_until_ready(out_g)
    rel_err_g = float(jnp.max(jnp.abs(out_g - ref)) / (jnp.max(jnp.abs(ref)) + 1e-6))
    assert rel_err_g < 5e-2, f"gram path mismatch vs reference: {rel_err_g}"

    print("KERNEL_OK")
</pallas_src>

<mosaic_0001>
module attributes {stable_mosaic.version = 11 : i64} {
  func.func @_tikhonov_cg_kernel(%arg0: i32, %arg1: memref<8x128xf32, #tpu.memory_space<vmem>>, %arg2: memref<8x128xf32, #tpu.memory_space<vmem>>, %arg3: memref<128x128xf32, #tpu.memory_space<vmem>>, %arg4: memref<1xf32, #tpu.memory_space<smem>>, %arg5: memref<8x128xf32, #tpu.memory_space<vmem>>) attributes {dimension_semantics = [#tpu.dimension_semantics<arbitrary>], iteration_bounds = array<i64: 1>, scalar_prefetch = 0 : i64, scratch_operands = 0 : i64, tpu.core_type = #tpu.core_type<tc>, window_params = [{pipeline_mode = #tpu.pipeline_mode<synchronous>, transform_indices = @transform_0, window_bounds = array<i64: 8, 128>}, {pipeline_mode = #tpu.pipeline_mode<synchronous>, transform_indices = @transform_1, window_bounds = array<i64: 8, 128>}, {pipeline_mode = #tpu.pipeline_mode<synchronous>, transform_indices = @transform_2, window_bounds = array<i64: 128, 128>}, {transform_indices = @transform_3, window_bounds = array<i64: 1>}, {pipeline_mode = #tpu.pipeline_mode<synchronous>, transform_indices = @transform_4, window_bounds = array<i64: 8, 128>}]} {
    %c0 = arith.constant 0 : index
    %c0_0 = arith.constant 0 : index
    %0 = vector.load %arg3[%c0, %c0_0] : memref<128x128xf32, #tpu.memory_space<vmem>>, vector<128x128xf32>
    %c0_1 = arith.constant 0 : index
    %1 = memref.load %arg4[%c0_1] : memref<1xf32, #tpu.memory_space<smem>>
    %c0_2 = arith.constant 0 : index
    %c0_3 = arith.constant 0 : index
    %2 = vector.load %arg1[%c0_2, %c0_3] : memref<8x128xf32, #tpu.memory_space<vmem>>, vector<8x128xf32>
    %c0_4 = arith.constant 0 : index
    %c0_5 = arith.constant 0 : index
    %3 = vector.load %arg2[%c0_4, %c0_5] : memref<8x128xf32, #tpu.memory_space<vmem>>, vector<8x128xf32>
    %cst = arith.constant dense<0.000000e+00> : vector<8x128xf32>
    %4 = tpu.matmul %3, %0, %cst {dimension_numbers = #tpu.dot_dimension_numbers<[1], [1], [0], [0], [0, 0, 1, 0], [], []>} : vector<8x128xf32>, vector<128x128xf32>, vector<8x128xf32> -> vector<8x128xf32>
    %5 = arith.subf %2, %4 : vector<8x128xf32>
    %cst_6 = arith.constant 0.000000e+00 : f32
    %6 = vector.broadcast %cst_6 : f32 to vector<8x128xf32>
    %7 = arith.mulf %5, %5 : vector<8x128xf32>
    %cst_7 = arith.constant dense<0.000000e+00> : vector<8xf32>
    %8 = vector.multi_reduction <add>, %7, %cst_7 [1] : vector<8x128xf32> to vector<8xf32>
    %9 = vector.shape_cast %8 : vector<8xf32> to vector<8x1xf32>
    %cst_8 = arith.constant dense<0.000000e+00> : vector<1xf32>
    %10 = vector.multi_reduction <add>, %9, %cst_8 [0] : vector<8x1xf32> to vector<1xf32>
    %11 = vector.shape_cast %10 : vector<1xf32> to vector<1x1xf32>
    %cst_9 = arith.constant 1.000000e+00 : f32
    %12 = vector.broadcast %cst_9 : f32 to vector<1x1xf32>
    %cst_10 = arith.constant 9.99999997E-7 : f32
    %13 = vector.broadcast %cst_10 : f32 to vector<1x1xf32>
    %14 = arith.cmpf ogt, %12, %13 : vector<1x1xf32>
    %cst_11 = arith.constant dense<0.000000e+00> : vector<8x128xf32>
    %15 = tpu.matmul %5, %0, %cst_11 {dimension_numbers = #tpu.dot_dimension_numbers<[1], [0], [0], [1], [0, 0, 1, 1], [], []>} : vector<8x128xf32>, vector<128x128xf32>, vector<8x128xf32> -> vector<8x128xf32>
    %cst_12 = arith.constant dense<0.000000e+00> : vector<8x128xf32>
    %16 = tpu.matmul %15, %0, %cst_12 {dimension_numbers = #tpu.dot_dimension_numbers<[1], [1], [0], [0], [0, 0, 1, 0], [], []>} : vector<8x128xf32>, vector<128x128xf32>, vector<8x128xf32> -> vector<8x128xf32>
    %17 = vector.broadcast %1 : f32 to vector<8x128xf32>
    %18 = arith.mulf %17, %5 : vector<8x128xf32>
    %19 = arith.addf %16, %18 : vector<8x128xf32>
    %20 = arith.mulf %5, %19 : vector<8x128xf32>
    %cst_13 = arith.constant dense<0.000000e+00> : vector<8xf32>
    %21 = vector.multi_reduction <add>, %20, %cst_13 [1] : vector<8x128xf32> to vector<8xf32>
    %22 = vector.shape_cast %21 : vector<8xf32> to vector<8x1xf32>
    %cst_14 = arith.constant dense<0.000000e+00> : vector<1xf32>
    %23 = vector.multi_reduction <add>, %22, %cst_14 [0] : vector<8x1xf32> to vector<1xf32>
    %24 = vector.shape_cast %23 : vector<1xf32> to vector<1x1xf32>
    %25 = arith.divf %11, %24 : vector<1x1xf32>
    %cst_15 = arith.constant 0.000000e+00 : f32
    %26 = vector.broadcast %cst_15 : f32 to vector<1x1xf32>
    %27 = arith.select %14, %25, %26 : vector<1x1xi1>, vector<1x1xf32>
    %28 = vector.broadcast %27 : vector<1x1xf32> to vector<8x128xf32>
    %29 = arith.mulf %28, %5 : vector<8x128xf32>
    %30 = arith.addf %6, %29 : vector<8x128xf32>
    %31 = vector.broadcast %27 : vector<1x1xf32> to vector<8x128xf32>
    %32 = arith.mulf %31, %19 : vector<8x128xf32>
    %33 = arith.subf %5, %32 : vector<8x128xf32>
    %34 = arith.mulf %33, %33 : vector<8x128xf32>
    %cst_16 = arith.constant dense<0.000000e+00> : vector<8xf32>
    %35 = vector.multi_reduction <add>, %34, %cst_16 [1] : vector<8x128xf32> to vector<8xf32>
    %36 = vector.shape_cast %35 : vector<8xf32> to vector<8x1xf32>
    %cst_17 = arith.constant dense<0.000000e+00> : vector<1xf32>
    %37 = vector.multi_reduction <add>, %36, %cst_17 [0] : vector<8x1xf32> to vector<1xf32>
    %38 = vector.shape_cast %37 : vector<1xf32> to vector<1x1xf32>
    %39 = arith.divf %38, %11 : vector<1x1xf32>
    %cst_18 = arith.constant 0.000000e+00 : f32
    %40 = vector.broadcast %cst_18 : f32 to vector<1x1xf32>
    %41 = arith.select %14, %39, %40 : vector<1x1xi1>, vector<1x1xf32>
    %42 = vector.broadcast %41 : vector<1x1xf32> to vector<8x128xf32>
    %43 = arith.mulf %42, %5 : vector<8x128xf32>
    %44 = arith.addf %33, %43 : vector<8x128xf32>
    %45 = arith.select %14, %38, %11 : vector<1x1xi1>, vector<1x1xf32>
    %46 = arith.select %14, %27, %12 : vector<1x1xi1>, vector<1x1xf32>
    %cst_19 = arith.constant 9.99999997E-7 : f32
    %47 = vector.broadcast %cst_19 : f32 to vector<1x1xf32>
    %48 = arith.cmpf ogt, %46, %47 : vector<1x1xf32>
    %cst_20 = arith.constant dense<0.000000e+00> : vector<8x128xf32>
    %49 = tpu.matmul %44, %0, %cst_20 {dimension_numbers = #tpu.dot_dimension_numbers<[1], [0], [0], [1], [0, 0, 1, 1], [], []>} : vector<8x128xf32>, vector<128x128xf32>, vector<8x128xf32> -> vector<8x128xf32>
    %cst_21 = arith.constant dense<0.000000e+00> : vector<8x128xf32>
    %50 = tpu.matmul %49, %0, %cst_21 {dimension_numbers = #tpu.dot_dimension_numbers<[1], [1], [0], [0], [0, 0, 1, 0], [], []>} : vector<8x128xf32>, vector<128x128xf32>, vector<8x128xf32> -> vector<8x128xf32>
    %51 = vector.broadcast %1 : f32 to vector<8x128xf32>
    %52 = arith.mulf %51, %44 : vector<8x128xf32>
    %53 = arith.addf %50, %52 : vector<8x128xf32>
    %54 = arith.mulf %44, %53 : vector<8x128xf32>
    %cst_22 = arith.constant dense<0.000000e+00> : vector<8xf32>
    %55 = vector.multi_reduction <add>, %54, %cst_22 [1] : vector<8x128xf32> to vector<8xf32>
    %56 = vector.shape_cast %55 : vector<8xf32> to vector<8x1xf32>
    %cst_23 = arith.constant dense<0.000000e+00> : vector<1xf32>
    %57 = vector.multi_reduction <add>, %56, %cst_23 [0] : vector<8x1xf32> to vector<1xf32>
    %58 = vector.shape_cast %57 : vector<1xf32> to vector<1x1xf32>
    %59 = arith.divf %45, %58 : vector<1x1xf32>
    %cst_24 = arith.constant 0.000000e+00 : f32
    %60 = vector.broadcast %cst_24 : f32 to vector<1x1xf32>
    %61 = arith.select %48, %59, %60 : vector<1x1xi1>, vector<1x1xf32>
    %62 = vector.broadcast %61 : vector<1x1xf32> to vector<8x128xf32>
    %63 = arith.mulf %62, %44 : vector<8x128xf32>
    %64 = arith.addf %30, %63 : vector<8x128xf32>
    %65 = vector.broadcast %61 : vector<1x1xf32> to vector<8x128xf32>
    %66 = arith.mulf %65, %53 : vector<8x128xf32>
    %67 = arith.subf %33, %66 : vector<8x128xf32>
    %68 = arith.mulf %67, %67 : vector<8x128xf32>
    %cst_25 = arith.constant dense<0.000000e+00> : vector<8xf32>
    %69 = vector.multi_reduction <add>, %68, %cst_25 [1] : vector<8x128xf32> to vector<8xf32>
    %70 = vector.shape_cast %69 : vector<8xf32> to vector<8x1xf32>
    %cst_26 = arith.constant dense<0.000000e+00> : vector<1xf32>
    %71 = vector.multi_reduction <add>, %70, %cst_26 [0] : vector<8x1xf32> to vector<1xf32>
    %72 = vector.shape_cast %71 : vector<1xf32> to vector<1x1xf32>
    %73 = arith.divf %72, %45 : vector<1x1xf32>
    %cst_27 = arith.constant 0.000000e+00 : f32
    %74 = vector.broadcast %cst_27 : f32 to vector<1x1xf32>
    %75 = arith.select %48, %73, %74 : vector<1x1xi1>, vector<1x1xf32>
    %76 = vector.broadcast %75 : vector<1x1xf32> to vector<8x128xf32>
    %77 = arith.mulf %76, %44 : vector<8x128xf32>
    %78 = arith.addf %67, %77 : vector<8x128xf32>
    %79 = arith.select %48, %72, %45 : vector<1x1xi1>, vector<1x1xf32>
    %80 = arith.select %48, %61, %46 : vector<1x1xi1>, vector<1x1xf32>
    %cst_28 = arith.constant 9.99999997E-7 : f32
    %81 = vector.broadcast %cst_28 : f32 to vector<1x1xf32>
    %82 = arith.cmpf ogt, %80, %81 : vector<1x1xf32>
    %cst_29 = arith.constant dense<0.000000e+00> : vector<8x128xf32>
    %83 = tpu.matmul %78, %0, %cst_29 {dimension_numbers = #tpu.dot_dimension_numbers<[1], [0], [0], [1], [0, 0, 1, 1], [], []>} : vector<8x128xf32>, vector<128x128xf32>, vector<8x128xf32> -> vector<8x128xf32>
    %cst_30 = arith.constant dense<0.000000e+00> : vector<8x128xf32>
    %84 = tpu.matmul %83, %0, %cst_30 {dimension_numbers = #tpu.dot_dimension_numbers<[1], [1], [0], [0], [0, 0, 1, 0], [], []>} : vector<8x128xf32>, vector<128x128xf32>, vector<8x128xf32> -> vector<8x128xf32>
    %85 = vector.broadcast %1 : f32 to vector<8x128xf32>
    %86 = arith.mulf %85, %78 : vector<8x128xf32>
    %87 = arith.addf %84, %86 : vector<8x128xf32>
    %88 = arith.mulf %78, %87 : vector<8x128xf32>
    %cst_31 = arith.constant dense<0.000000e+00> : vector<8xf32>
    %89 = vector.multi_reduction <add>, %88, %cst_31 [1] : vector<8x128xf32> to vector<8xf32>
    %90 = vector.shape_cast %89 : vector<8xf32> to vector<8x1xf32>
    %cst_32 = arith.constant dense<0.000000e+00> : vector<1xf32>
    %91 = vector.multi_reduction <add>, %90, %cst_32 [0] : vector<8x1xf32> to vector<1xf32>
    %92 = vector.shape_cast %91 : vector<1xf32> to vector<1x1xf32>
    %93 = arith.divf %79, %92 : vector<1x1xf32>
    %cst_33 = arith.constant 0.000000e+00 : f32
    %94 = vector.broadcast %cst_33 : f32 to vector<1x1xf32>
    %95 = arith.select %82, %93, %94 : vector<1x1xi1>, vector<1x1xf32>
    %96 = vector.broadcast %95 : vector<1x1xf32> to vector<8x128xf32>
    %97 = arith.mulf %96, %78 : vector<8x128xf32>
    %98 = arith.addf %64, %97 : vector<8x128xf32>
    %99 = vector.broadcast %95 : vector<1x1xf32> to vector<8x128xf32>
    %100 = arith.mulf %99, %87 : vector<8x128xf32>
    %101 = arith.subf %67, %100 : vector<8x128xf32>
    %102 = arith.mulf %101, %101 : vector<8x128xf32>
    %cst_34 = arith.constant dense<0.000000e+00> : vector<8xf32>
    %103 = vector.multi_reduction <add>, %102, %cst_34 [1] : vector<8x128xf32> to vector<8xf32>
    %104 = vector.shape_cast %103 : vector<8xf32> to vector<8x1xf32>
    %cst_35 = arith.constant dense<0.000000e+00> : vector<1xf32>
    %105 = vector.multi_reduction <add>, %104, %cst_35 [0] : vector<8x1xf32> to vector<1xf32>
    %106 = vector.shape_cast %105 : vector<1xf32> to vector<1x1xf32>
    %107 = arith.divf %106, %79 : vector<1x1xf32>
    %cst_36 = arith.constant 0.000000e+00 : f32
    %108 = vector.broadcast %cst_36 : f32 to vector<1x1xf32>
    %109 = arith.select %82, %107, %108 : vector<1x1xi1>, vector<1x1xf32>
    %110 = vector.broadcast %109 : vector<1x1xf32> to vector<8x128xf32>
    %111 = arith.mulf %110, %78 : vector<8x128xf32>
    %112 = arith.addf %101, %111 : vector<8x128xf32>
    %113 = arith.select %82, %106, %79 : vector<1x1xi1>, vector<1x1xf32>
    %114 = arith.select %82, %95, %80 : vector<1x1xi1>, vector<1x1xf32>
    %cst_37 = arith.constant 9.99999997E-7 : f32
    %115 = vector.broadcast %cst_37 : f32 to vector<1x1xf32>
    %116 = arith.cmpf ogt, %114, %115 : vector<1x1xf32>
    %cst_38 = arith.constant dense<0.000000e+00> : vector<8x128xf32>
    %117 = tpu.matmul %112, %0, %cst_38 {dimension_numbers = #tpu.dot_dimension_numbers<[1], [0], [0], [1], [0, 0, 1, 1], [], []>} : vector<8x128xf32>, vector<128x128xf32>, vector<8x128xf32> -> vector<8x128xf32>
    %cst_39 = arith.constant dense<0.000000e+00> : vector<8x128xf32>
    %118 = tpu.matmul %117, %0, %cst_39 {dimension_numbers = #tpu.dot_dimension_numbers<[1], [1], [0], [0], [0, 0, 1, 0], [], []>} : vector<8x128xf32>, vector<128x128xf32>, vector<8x128xf32> -> vector<8x128xf32>
    %119 = vector.broadcast %1 : f32 to vector<8x128xf32>
    %120 = arith.mulf %119, %112 : vector<8x128xf32>
    %121 = arith.addf %118, %120 : vector<8x128xf32>
    %122 = arith.mulf %112, %121 : vector<8x128xf32>
    %cst_40 = arith.constant dense<0.000000e+00> : vector<8xf32>
    %123 = vector.multi_reduction <add>, %122, %cst_40 [1] : vector<8x128xf32> to vector<8xf32>
    %124 = vector.shape_cast %123 : vector<8xf32> to vector<8x1xf32>
    %cst_41 = arith.constant dense<0.000000e+00> : vector<1xf32>
    %125 = vector.multi_reduction <add>, %124, %cst_41 [0] : vector<8x1xf32> to vector<1xf32>
    %126 = vector.shape_cast %125 : vector<1xf32> to vector<1x1xf32>
    %127 = arith.divf %113, %126 : vector<1x1xf32>
    %cst_42 = arith.constant 0.000000e+00 : f32
    %128 = vector.broadcast %cst_42 : f32 to vector<1x1xf32>
    %129 = arith.select %116, %127, %128 : vector<1x1xi1>, vector<1x1xf32>
    %130 = vector.broadcast %129 : vector<1x1xf32> to vector<8x128xf32>
    %131 = arith.mulf %130, %112 : vector<8x128xf32>
    %132 = arith.addf %98, %131 : vector<8x128xf32>
    %133 = vector.broadcast %129 : vector<1x1xf32> to vector<8x128xf32>
    %134 = arith.mulf %133, %121 : vector<8x128xf32>
    %135 = arith.subf %101, %134 : vector<8x128xf32>
    %136 = arith.mulf %135, %135 : vector<8x128xf32>
    %cst_43 = arith.constant dense<0.000000e+00> : vector<8xf32>
    %137 = vector.multi_reduction <add>, %136, %cst_43 [1] : vector<8x128xf32> to vector<8xf32>
    %138 = vector.shape_cast %137 : vector<8xf32> to vector<8x1xf32>
    %cst_44 = arith.constant dense<0.000000e+00> : vector<1xf32>
    %139 = vector.multi_reduction <add>, %138, %cst_44 [0] : vector<8x1xf32> to vector<1xf32>
    %140 = vector.shape_cast %139 : vector<1xf32> to vector<1x1xf32>
    %141 = arith.divf %140, %113 : vector<1x1xf32>
    %cst_45 = arith.constant 0.000000e+00 : f32
    %142 = vector.broadcast %cst_45 : f32 to vector<1x1xf32>
    %143 = arith.select %116, %141, %142 : vector<1x1xi1>, vector<1x1xf32>
    %144 = vector.broadcast %143 : vector<1x1xf32> to vector<8x128xf32>
    %145 = arith.mulf %144, %112 : vector<8x128xf32>
    %146 = arith.addf %135, %145 : vector<8x128xf32>
    %147 = arith.select %116, %140, %113 : vector<1x1xi1>, vector<1x1xf32>
    %148 = arith.select %116, %129, %114 : vector<1x1xi1>, vector<1x1xf32>
    %cst_46 = arith.constant 9.99999997E-7 : f32
    %149 = vector.broadcast %cst_46 : f32 to vector<1x1xf32>
    %150 = arith.cmpf ogt, %148, %149 : vector<1x1xf32>
    %cst_47 = arith.constant dense<0.000000e+00> : vector<8x128xf32>
    %151 = tpu.matmul %146, %0, %cst_47 {dimension_numbers = #tpu.dot_dimension_numbers<[1], [0], [0], [1], [0, 0, 1, 1], [], []>} : vector<8x128xf32>, vector<128x128xf32>, vector<8x128xf32> -> vector<8x128xf32>
    %cst_48 = arith.constant dense<0.000000e+00> : vector<8x128xf32>
    %152 = tpu.matmul %151, %0, %cst_48 {dimension_numbers = #tpu.dot_dimension_numbers<[1], [1], [0], [0], [0, 0, 1, 0], [], []>} : vector<8x128xf32>, vector<128x128xf32>, vector<8x128xf32> -> vector<8x128xf32>
    %153 = vector.broadcast %1 : f32 to vector<8x128xf32>
    %154 = arith.mulf %153, %146 : vector<8x128xf32>
    %155 = arith.addf %152, %154 : vector<8x128xf32>
    %156 = arith.mulf %146, %155 : vector<8x128xf32>
    %cst_49 = arith.constant dense<0.000000e+00> : vector<8xf32>
    %157 = vector.multi_reduction <add>, %156, %cst_49 [1] : vector<8x128xf32> to vector<8xf32>
    %158 = vector.shape_cast %157 : vector<8xf32> to vector<8x1xf32>
    %cst_50 = arith.constant dense<0.000000e+00> : vector<1xf32>
    %159 = vector.multi_reduction <add>, %158, %cst_50 [0] : vector<8x1xf32> to vector<1xf32>
    %160 = vector.shape_cast %159 : vector<1xf32> to vector<1x1xf32>
    %161 = arith.divf %147, %160 : vector<1x1xf32>
    %cst_51 = arith.constant 0.000000e+00 : f32
    %162 = vector.broadcast %cst_51 : f32 to vector<1x1xf32>
    %163 = arith.select %150, %161, %162 : vector<1x1xi1>, vector<1x1xf32>
    %164 = vector.broadcast %163 : vector<1x1xf32> to vector<8x128xf32>
    %165 = arith.mulf %164, %146 : vector<8x128xf32>
    %166 = arith.addf %132, %165 : vector<8x128xf32>
    %c0_52 = arith.constant 0 : index
    %c0_53 = arith.constant 0 : index
    %167 = vector.load %arg2[%c0_52, %c0_53] : memref<8x128xf32, #tpu.memory_space<vmem>>, vector<8x128xf32>
    %cst_54 = arith.constant dense<0.000000e+00> : vector<8x128xf32>
    %168 = tpu.matmul %166, %0, %cst_54 {dimension_numbers = #tpu.dot_dimension_numbers<[1], [0], [0], [1], [0, 0, 1, 1], [], []>} : vector<8x128xf32>, vector<128x128xf32>, vector<8x128xf32> -> vector<8x128xf32>
    %169 = arith.addf %167, %168 : vector<8x128xf32>
    %c0_55 = arith.constant 0 : index
    %c0_56 = arith.constant 0 : index
    %170 = vector.load %arg5[%c0_55, %c0_56] : memref<8x128xf32, #tpu.memory_space<vmem>>, vector<8x128xf32>
    tpu.vector_store %arg5[%c0_55, %c0_56], %169 {strides = array<i32>} : memref<8x128xf32, #tpu.memory_space<vmem>>, vector<8x128xf32>,
    return
  }
  func.func @transform_0(%arg0: i32) -> (i32, i32) {
    %c0_i32 = arith.constant 0 : i32
    %c0_i32_0 = arith.constant 0 : i32
    %c0_i32_1 = arith.constant 0 : i32
    return %c0_i32, %c0_i32_0 : i32, i32
  }
  func.func @transform_1(%arg0: i32) -> (i32, i32) {
    %c0_i32 = arith.constant 0 : i32
    %c0_i32_0 = arith.constant 0 : i32
    %c0_i32_1 = arith.constant 0 : i32
    return %c0_i32, %c0_i32_0 : i32, i32
  }
  func.func @transform_2(%arg0: i32) -> (i32, i32) {
    %c0_i32 = arith.constant 0 : i32
    %c0_i32_0 = arith.constant 0 : i32
    %c0_i32_1 = arith.constant 0 : i32
    return %c0_i32, %c0_i32_0 : i32, i32
  }
  func.func @transform_3(%arg0: i32) -> i32 {
    %c0_i32 = arith.constant 0 : i32
    %c0_i32_0 = arith.constant 0 : i32
    return %c0_i32 : i32
  }
  func.func @transform_4(%arg0: i32) -> (i32, i32) {
    %c0_i32 = arith.constant 0 : i32
    %c0_i32_0 = arith.constant 0 : i32
    %c0_i32_1 = arith.constant 0 : i32
    return %c0_i32, %c0_i32_0 : i32, i32
  }
}

</mosaic_0001>

<llo_original>
// kernel: tikhonov_cg_forward.1
$region0: #{tikhonov_cg_forward.1}
  #allocation0 [shape = 'u32[]', space=smem, size = 0x4, offset = 0x4, fixed_abs, tag = 'smem constant byte address 0x4 - core index']
  #allocation1 [shape = 'u32[144,128]{1,0:T(1,128)}', space=vmem, size = 0x12000, scoped, tag = 'internal scratch']
  #allocation2 [shape = 'f32[1]{0:T(128)S(6)}', space=smem, size = 0x200, scoped, tag = 'scoped memory for tikhonov_cg_forward.1']
  %s0 = inlined_call_operand.vmem [shape: f32[8,128], index: 0, kind: input, shape index: {}]
  %s1 = inlined_call_operand.vmem [shape: f32[8,128], index: 1, kind: input, shape index: {}]
  %s2 = inlined_call_operand.vmem [shape: f32[128,128], index: 2, kind: input, shape index: {}]
  %s3 = inlined_call_operand.<no memory space> [shape: f32[1], index: 3, kind: input, shape index: {}]
  %s4 = inlined_call_operand.hbm [shape: f32[8,128], index: 4, kind: output, shape index: {}]
  %s5 = sld [smem:[#allocation0]]
  $region26: #{tikhonov_cg_forward.1} parent=0
    _
  %s7 = ssub.s32 1, %s5
  %s8 = scalar_select 0, %s7, %s5
  %9 = sst [smem:[#allocation2]] %s3
  $region1: #{tikhonov_cg_forward.1} parent=0
    #allocation3 [shape = 'u8[4096]{0}', space=vmem, size = 0x1000, scoped, tag = 'output window, operand 0, single buffered']
    #allocation4 [shape = 's32[1]{0}', space=sflag, size = 0x4, scoped, tag = 'scoped memory for tikhonov_cg_forward.1']
    %10 = vsyncpa [#allocation4], 0
    // Predicated region
    $region2: #{tikhonov_cg_forward.1} parent=1 // pred_check
      _
    $region3: #{tikhonov_cg_forward.1} parent=1 // pred_check_branch
      %12 = sbr.rel (0) target = $region5
    $region4: #{tikhonov_cg_forward.1} parent=1 // pred_region
      _
    $region5: #{tikhonov_cg_forward.1} parent=1 // pred_fallthru
      _
    // Predicated region
    $region6: #{tikhonov_cg_forward.1} parent=1 // pred_check
      _
    $region7: #{tikhonov_cg_forward.1} parent=1 // pred_check_branch
      %14 = sbr.rel (0) target = $region9
    $region8: #{tikhonov_cg_forward.1} parent=1 // pred_region
      _
    $region9: #{tikhonov_cg_forward.1} parent=1 // pred_fallthru
      _
    // Predicated region
    $region10: #{tikhonov_cg_forward.1} parent=1 // pred_check
      _
    $region11: #{tikhonov_cg_forward.1} parent=1 // pred_check_branch
      %16 = sbr.rel (0) target = $region13
    $region12: #{tikhonov_cg_forward.1} parent=1 // pred_region
      _
    $region13: #{tikhonov_cg_forward.1} parent=1 // pred_fallthru
      _
    // Predicated region
    $region14: #{tikhonov_cg_forward.1} parent=1 // pred_check
      _
    $region15: #{tikhonov_cg_forward.1} parent=1 // pred_check_branch
      %18 = sbr.rel (0) target = $region17
    $region16: #{tikhonov_cg_forward.1} parent=1 // pred_region
      _
    $region17: #{tikhonov_cg_forward.1} parent=1 // pred_fallthru
      _
    %v19 = vld [vmem:[%s2] sm:$0xff]
    %v20 = vld [vmem:[%s2 + $0x8] sm:$0xff]
    %v21 = vld [vmem:[%s2 + $0x10] sm:$0xff]
    %v22 = vld [vmem:[%s2 + $0x18] sm:$0xff]
    %v23 = vld [vmem:[%s2 + $0x20] sm:$0xff]
    %v24 = vld [vmem:[%s2 + $0x28] sm:$0xff]
    %v25 = vld [vmem:[%s2 + $0x30] sm:$0xff]
    %v26 = vld [vmem:[%s2 + $0x38] sm:$0xff]
    %v27 = vld [vmem:[%s2 + $0x40] sm:$0xff]
    %v28 = vld [vmem:[%s2 + $0x48] sm:$0xff]
    %v29 = vld [vmem:[%s2 + $0x50] sm:$0xff]
    %v30 = vld [vmem:[%s2 + $0x58] sm:$0xff]
    %v31 = vld [vmem:[%s2 + $0x60] sm:$0xff]
    %v32 = vld [vmem:[%s2 + $0x68] sm:$0xff]
    %v33 = vld [vmem:[%s2 + $0x70] sm:$0xff]
    %v34 = vld [vmem:[%s2 + $0x78] sm:$0xff]
    %s35 = sld [smem:[#allocation2]]
    %v36 = vld [vmem:[%s0] sm:$0xff]
    %v37 = vld [vmem:[%s1] sm:$0xff]
    %38 = vmatprep.subr.mxu0 0.0
    %39 = vmatpush1.xpose.msra.mxu0 %v34
    %40 = vmatprep.subr.mxu0 0.0
    %41 = vmatpush1.xpose.msra.mxu0 %v33
    %42 = vmatprep.subr.mxu0 0.0
    %43 = vmatpush1.xpose.msra.mxu0 %v32
    %44 = vmatprep.subr.mxu0 0.0
    %45 = vmatpush1.xpose.msra.mxu0 %v31
    %46 = vmatprep.subr.mxu0 0.0
    %47 = vmatpush1.xpose.msra.mxu0 %v30
    %48 = vmatprep.subr.mxu0 0.0
    %49 = vmatpush1.xpose.msra.mxu0 %v29
    %50 = vmatprep.subr.mxu0 0.0
    %51 = vmatpush1.xpose.msra.mxu0 %v28
    %52 = vmatprep.subr.mxu0 0.0
    %53 = vmatpush1.xpose.msra.mxu0 %v27
    %54 = vmatprep.subr.mxu0 0.0
    %55 = vmatpush1.xpose.msra.mxu0 %v26
    %56 = vmatprep.subr.mxu0 0.0
    %57 = vmatpush1.xpose.msra.mxu0 %v25
    %58 = vmatprep.subr.mxu0 0.0
    %59 = vmatpush1.xpose.msra.mxu0 %v24
    %60 = vmatprep.subr.mxu0 0.0
    %61 = vmatpush1.xpose.msra.mxu0 %v23
    %62 = vmatprep.subr.mxu0 0.0
    %63 = vmatpush1.xpose.msra.mxu0 %v22
    %64 = vmatprep.subr.mxu0 0.0
    %65 = vmatpush1.xpose.msra.mxu0 %v21
    %66 = vmatprep.subr.mxu0 0.0
    %67 = vmatpush1.xpose.msra.mxu0 %v20
    %68 = vmatprep.subr.mxu0 0.0
    %69 = vmatpush1.xpose.msra.mxu0 %v19
    %70 = vmatprep.subr.mxu0 0.0
    %71 = vmatpush2.xpose.msra.mxu0 0.0
    %72 = vmatprep.subr.mxu0 0.0
    %73 = vmatpush2.xpose.msra.mxu0 0.0
    %74 = vmatprep.subr.mxu0 0.0
    %75 = vmatpush2.xpose.msra.mxu0 0.0
    %76 = vmatprep.subr.mxu0 0.0
    %77 = vmatpush2.xpose.msra.mxu0 0.0
    %78 = vmatprep.subr.mxu0 0.0
    %79 = vmatpush2.xpose.msra.mxu0 0.0
    %80 = vmatprep.subr.mxu0 0.0
    %81 = vmatpush2.xpose.msra.mxu0 0.0
    %82 = vmatprep.subr.mxu0 0.0
    %83 = vmatpush2.xpose.msra.mxu0 0.0
    %84 = vmatprep.subr.mxu0 0.0
    %85 = vmatpush2.xpose.msra.mxu0 0.0
    %86 = vmatprep.subr.mxu0 0.0
    %87 = vmatpush2.xpose.msra.mxu0 0.0
    %88 = vmatprep.subr.mxu0 0.0
    %89 = vmatpush2.xpose.msra.mxu0 0.0
    %90 = vmatprep.subr.mxu0 0.0
    %91 = vmatpush2.xpose.msra.mxu0 0.0
    %92 = vmatprep.subr.mxu0 0.0
    %93 = vmatpush2.xpose.msra.mxu0 0.0
    %94 = vmatprep.subr.mxu0 0.0
    %95 = vmatpush2.xpose.msra.mxu0 0.0
    %96 = vmatprep.subr.mxu0 0.0
    %97 = vmatpush2.xpose.msra.mxu0 0.0
    %98 = vmatprep.subr.mxu0 0.0
    %99 = vmatpush2.xpose.msra.mxu0 0.0
    %100 = vmatprep.subr.mxu0 0.0
    %101 = vmatpush2.xpose.msra.mxu0 0.0
    %102 = vmatprep.mubr.f32.mxu0 0.0
    %103 = vmatmul.mubr.f32.gmra.mxu0 %v37
    %v104 = vpop.f32.mrf.mxu0
    %v105 = vadd.f32 0.0, %v104
    %v106 = vpop.f32.mrf.mxu0
    %107 = vdwg.mxu0
    %v108 = vsub.f32 %v36, %v105
    %v109 = vmul.f32 %v108, %v108
    %110 = vadd.xlane.f32.xlu0 %v109
    %v111 = vpop.xlane.xlu0 %110
    %v112 = vrot.slane %v111, 4
    %v113 = vadd.f32 %v111, %v112
    %v114 = vrot.slane %v113, 2
    %v115 = vadd.f32 %v113, %v114
    %v116 = vrot.slane %v115, 1
    %v117 = vadd.f32 %v115, %v116
    %vm118 = vcmp.gt.f32.partialorder 1.0, 1e-06
    %119 = vmatprep.subr.mxu0 0.0
    %120 = vmatpush1.msra.mxu0 %v34
    %121 = vmatprep.subr.mxu0 0.0
    %122 = vmatpush1.msra.mxu0 %v33
    %123 = vmatprep.subr.mxu0 0.0
    %124 = vmatpush1.msra.mxu0 %v32
    %125 = vmatprep.subr.mxu0 0.0
    %126 = vmatpush1.msra.mxu0 %v31
    %127 = vmatprep.subr.mxu0 0.0
    %128 = vmatpush1.msra.mxu0 %v30
    %129 = vmatprep.subr.mxu0 0.0
    %130 = vmatpush1.msra.mxu0 %v29
    %131 = vmatprep.subr.mxu0 0.0
    %132 = vmatpush1.msra.mxu0 %v28
    %133 = vmatprep.subr.mxu0 0.0
    %134 = vmatpush1.msra.mxu0 %v27
    %135 = vmatprep.subr.mxu0 0.0
    %136 = vmatpush1.msra.mxu0 %v26
    %137 = vmatprep.subr.mxu0 0.0
    %138 = vmatpush1.msra.mxu0 %v25
    %139 = vmatprep.subr.mxu0 0.0
    %140 = vmatpush1.msra.mxu0 %v24
    %141 = vmatprep.subr.mxu0 0.0
    %142 = vmatpush1.msra.mxu0 %v23
    %143 = vmatprep.subr.mxu0 0.0
    %144 = vmatpush1.msra.mxu0 %v22
    %145 = vmatprep.subr.mxu0 0.0
    %146 = vmatpush1.msra.mxu0 %v21
    %147 = vmatprep.subr.mxu0 0.0
    %148 = vmatpush1.msra.mxu0 %v20
    %149 = vmatprep.subr.mxu0 0.0
    %150 = vmatpush1.msra.mxu0 %v19
    %151 = vmatprep.subr.mxu0 0.0
    %152 = vmatpush2.msra.mxu0 0.0
    %153 = vmatprep.subr.mxu0 0.0
    %154 = vmatpush2.msra.mxu0 0.0
    %155 = vmatprep.subr.mxu0 0.0
    %156 = vmatpush2.msra.mxu0 0.0
    %157 = vmatprep.subr.mxu0 0.0
    %158 = vmatpush2.msra.mxu0 0.0
    %159 = vmatprep.subr.mxu0 0.0
    %160 = vmatpush2.msra.mxu0 0.0
    %161 = vmatprep.subr.mxu0 0.0
    %162 = vmatpush2.msra.mxu0 0.0
    %163 = vmatprep.subr.mxu0 0.0
    %164 = vmatpush2.msra.mxu0 0.0
    %165 = vmatprep.subr.mxu0 0.0
    %166 = vmatpush2.msra.mxu0 0.0
    %167 = vmatprep.subr.mxu0 0.0
    %168 = vmatpush2.msra.mxu0 0.0
    %169 = vmatprep.subr.mxu0 0.0
    %170 = vmatpush2.msra.mxu0 0.0
    %171 = vmatprep.subr.mxu0 0.0
    %172 = vmatpush2.msra.mxu0 0.0
    %173 = vmatprep.subr.mxu0 0.0
    %174 = vmatpush2.msra.mxu0 0.0
    %175 = vmatprep.subr.mxu0 0.0
    %176 = vmatpush2.msra.mxu0 0.0
    %177 = vmatprep.subr.mxu0 0.0
    %178 = vmatpush2.msra.mxu0 0.0
    %179 = vmatprep.subr.mxu0 0.0
    %180 = vmatpush2.msra.mxu0 0.0
    %181 = vmatprep.subr.mxu0 0.0
    %182 = vmatpush2.msra.mxu0 0.0
    %183 = vmatprep.mubr.f32.mxu0 0.0
    %184 = vmatmul.mubr.f32.gmra.mxu0 %v108
    %v185 = vpop.f32.mrf.mxu0
    %v186 = vadd.f32 0.0, %v185
    %v187 = vpop.f32.mrf.mxu0
    %188 = vdwg.mxu0
    %v189 = vstv %s35
    %v190 = vmul.f32 %v189, %v108
    %191 = vmatprep.subr.mxu0 0.0
    %192 = vmatpush1.xpose.msra.mxu0 %v34
    %193 = vmatprep.subr.mxu0 0.0
    %194 = vmatpush1.xpose.msra.mxu0 %v33
    %195 = vmatprep.subr.mxu0 0.0
    %196 = vmatpush1.xpose.msra.mxu0 %v32
    %197 = vmatprep.subr.mxu0 0.0
    %198 = vmatpush1.xpose.msra.mxu0 %v31
    %199 = vmatprep.subr.mxu0 0.0
    %200 = vmatpush1.xpose.msra.mxu0 %v30
    %201 = vmatprep.subr.mxu0 0.0
    %202 = vmatpush1.xpose.msra.mxu0 %v29
    %203 = vmatprep.subr.mxu0 0.0
    %204 = vmatpush1.xpose.msra.mxu0 %v28
    %205 = vmatprep.subr.mxu0 0.0
    %206 = vmatpush1.xpose.msra.mxu0 %v27
    %207 = vmatprep.subr.mxu0 0.0
    %208 = vmatpush1.xpose.msra.mxu0 %v26
    %209 = vmatprep.subr.mxu0 0.0
    %210 = vmatpush1.xpose.msra.mxu0 %v25
    %211 = vmatprep.subr.mxu0 0.0
    %212 = vmatpush1.xpose.msra.mxu0 %v24
    %213 = vmatprep.subr.mxu0 0.0
    %214 = vmatpush1.xpose.msra.mxu0 %v23
    %215 = vmatprep.subr.mxu0 0.0
    %216 = vmatpush1.xpose.msra.mxu0 %v22
    %217 = vmatprep.subr.mxu0 0.0
    %218 = vmatpush1.xpose.msra.mxu0 %v21
    %219 = vmatprep.subr.mxu0 0.0
    %220 = vmatpush1.xpose.msra.mxu0 %v20
    %221 = vmatprep.subr.mxu0 0.0
    %222 = vmatpush1.xpose.msra.mxu0 %v19
    %223 = vmatprep.subr.mxu0 0.0
    %224 = vmatpush2.xpose.msra.mxu0 0.0
    %225 = vmatprep.subr.mxu0 0.0
    %226 = vmatpush2.xpose.msra.mxu0 0.0
    %227 = vmatprep.subr.mxu0 0.0
    %228 = vmatpush2.xpose.msra.mxu0 0.0
    %229 = vmatprep.subr.mxu0 0.0
    %230 = vmatpush2.xpose.msra.mxu0 0.0
    %231 = vmatprep.subr.mxu0 0.0
    %232 = vmatpush2.xpose.msra.mxu0 0.0
    %233 = vmatprep.subr.mxu0 0.0
    %234 = vmatpush2.xpose.msra.mxu0 0.0
    %235 = vmatprep.subr.mxu0 0.0
    %236 = vmatpush2.xpose.msra.mxu0 0.0
    %237 = vmatprep.subr.mxu0 0.0
    %238 = vmatpush2.xpose.msra.mxu0 0.0
    %239 = vmatprep.subr.mxu0 0.0
    %240 = vmatpush2.xpose.msra.mxu0 0.0
    %241 = vmatprep.subr.mxu0 0.0
    %242 = vmatpush2.xpose.msra.mxu0 0.0
    %243 = vmatprep.subr.mxu0 0.0
    %244 = vmatpush2.xpose.msra.mxu0 0.0
    %245 = vmatprep.subr.mxu0 0.0
    %246 = vmatpush2.xpose.msra.mxu0 0.0
    %247 = vmatprep.subr.mxu0 0.0
    %248 = vmatpush2.xpose.msra.mxu0 0.0
    %249 = vmatprep.subr.mxu0 0.0
    %250 = vmatpush2.xpose.msra.mxu0 0.0
    %251 = vmatprep.subr.mxu0 0.0
    %252 = vmatpush2.xpose.msra.mxu0 0.0
    %253 = vmatprep.subr.mxu0 0.0
    %254 = vmatpush2.xpose.msra.mxu0 0.0
    %255 = vmatprep.mubr.f32.mxu0 0.0
    %256 = vmatmul.mubr.f32.gmra.mxu0 %v186
    %v257 = vpop.f32.mrf.mxu0
    %v258 = vadd.f32 %v190, %v257
    %v259 = vpop.f32.mrf.mxu0
    %260 = vdwg.mxu0
    %v261 = vmul.f32 %v108, %v258
    %262 = vadd.xlane.f32.xlu0 %v261
    %v263 = vpop.xlane.xlu0 %262
    %v264 = vrot.slane %v263, 4
    %v265 = vadd.f32 %v263, %v264
    %v266 = vrot.slane %v265, 2
    %v267 = vadd.f32 %v265, %v266
    %v268 = vrot.slane %v267, 1
    %v269 = vadd.f32 %v267, %v268
    %v270 = vrcp.pop %v269
    %v271 = vmul.f32 %v117, %v270
    %v272 = vsel %vm118, %v271, 0.0
    %v273 = vmul.f32 %v272, %v108
    %v274 = vadd.f32 %v273, 0.0
    %v275 = vmul.f32 %v272, %v258
    %v276 = vsub.f32 %v108, %v275
    %v277 = vmul.f32 %v276, %v276
    %278 = vadd.xlane.f32.xlu0 %v277
    %v279 = vpop.xlane.xlu0 %278
    %v280 = vrot.slane %v279, 4
    %v281 = vadd.f32 %v279, %v280
    %v282 = vrot.slane %v281, 2
    %v283 = vadd.f32 %v281, %v282
    %v284 = vrot.slane %v283, 1
    %v285 = vadd.f32 %v283, %v284
    %v286 = vrcp.pop %v117
    %v287 = vmul.f32 %v285, %v286
    %v288 = vsel %vm118, %v287, 0.0
    %v289 = vmul.f32 %v288, %v108
    %v290 = vadd.f32 %v276, %v289
    %v291 = vsel %vm118, %v285, %v117
    %v292 = vsel %vm118, %v271, 1.0
    %vm293 = vcmp.gt.f32.partialorder %v292, 1e-06
    %294 = vmatprep.subr.mxu0 0.0
    %295 = vmatpush1.msra.mxu0 %v34
    %296 = vmatprep.subr.mxu0 0.0
    %297 = vmatpush1.msra.mxu0 %v33
    %298 = vmatprep.subr.mxu0 0.0
    %299 = vmatpush1.msra.mxu0 %v32
    %300 = vmatprep.subr.mxu0 0.0
    %301 = vmatpush1.msra.mxu0 %v31
    %302 = vmatprep.subr.mxu0 0.0
    %303 = vmatpush1.msra.mxu0 %v30
    %304 = vmatprep.subr.mxu0 0.0
    %305 = vmatpush1.msra.mxu0 %v29
    %306 = vmatprep.subr.mxu0 0.0
    %307 = vmatpush1.msra.mxu0 %v28
    %308 = vmatprep.subr.mxu0 0.0
    %309 = vmatpush1.msra.mxu0 %v27
    %310 = vmatprep.subr.mxu0 0.0
    %311 = vmatpush1.msra.mxu0 %v26
    %312 = vmatprep.subr.mxu0 0.0
    %313 = vmatpush1.msra.mxu0 %v25
    %314 = vmatprep.subr.mxu0 0.0
    %315 = vmatpush1.msra.mxu0 %v24
    %316 = vmatprep.subr.mxu0 0.0
    %317 = vmatpush1.msra.mxu0 %v23
    %318 = vmatprep.subr.mxu0 0.0
    %319 = vmatpush1.msra.mxu0 %v22
    %320 = vmatprep.subr.mxu0 0.0
    %321 = vmatpush1.msra.mxu0 %v21
    %322 = vmatprep.subr.mxu0 0.0
    %323 = vmatpush1.msra.mxu0 %v20
    %324 = vmatprep.subr.mxu0 0.0
    %325 = vmatpush1.msra.mxu0 %v19
    %326 = vmatprep.subr.mxu0 0.0
    %327 = vmatpush2.msra.mxu0 0.0
    %328 = vmatprep.subr.mxu0 0.0
    %329 = vmatpush2.msra.mxu0 0.0
    %330 = vmatprep.subr.mxu0 0.0
    %331 = vmatpush2.msra.mxu0 0.0
    %332 = vmatprep.subr.mxu0 0.0
    %333 = vmatpush2.msra.mxu0 0.0
    %334 = vmatprep.subr.mxu0 0.0
    %335 = vmatpush2.msra.mxu0 0.0
    %336 = vmatprep.subr.mxu0 0.0
    %337 = vmatpush2.msra.mxu0 0.0
    %338 = vmatprep.subr.mxu0 0.0
    %339 = vmatpush2.msra.mxu0 0.0
    %340 = vmatprep.subr.mxu0 0.0
    %341 = vmatpush2.msra.mxu0 0.0
    %342 = vmatprep.subr.mxu0 0.0
    %343 = vmatpush2.msra.mxu0 0.0
    %344 = vmatprep.subr.mxu0 0.0
    %345 = vmatpush2.msra.mxu0 0.0
    %346 = vmatprep.subr.mxu0 0.0
    %347 = vmatpush2.msra.mxu0 0.0
    %348 = vmatprep.subr.mxu0 0.0
    %349 = vmatpush2.msra.mxu0 0.0
    %350 = vmatprep.subr.mxu0 0.0
    %351 = vmatpush2.msra.mxu0 0.0
    %352 = vmatprep.subr.mxu0 0.0
    %353 = vmatpush2.msra.mxu0 0.0
    %354 = vmatprep.subr.mxu0 0.0
    %355 = vmatpush2.msra.mxu0 0.0
    %356 = vmatprep.subr.mxu0 0.0
    %357 = vmatpush2.msra.mxu0 0.0
    %358 = vmatprep.mubr.f32.mxu0 0.0
    %359 = vmatmul.mubr.f32.gmra.mxu0 %v290
    %v360 = vpop.f32.mrf.mxu0
    %v361 = vadd.f32 0.0, %v360
    %v362 = vpop.f32.mrf.mxu0
    %363 = vdwg.mxu0
    %v364 = vmul.f32 %v189, %v290
    %365 = vmatprep.subr.mxu0 0.0
    %366 = vmatpush1.xpose.msra.mxu0 %v34
    %367 = vmatprep.subr.mxu0 0.0
    %368 = vmatpush1.xpose.msra.mxu0 %v33
    %369 = vmatprep.subr.mxu0 0.0
    %370 = vmatpush1.xpose.msra.mxu0 %v32
    %371 = vmatprep.subr.mxu0 0.0
    %372 = vmatpush1.xpose.msra.mxu0 %v31
    %373 = vmatprep.subr.mxu0 0.0
    %374 = vmatpush1.xpose.msra.mxu0 %v30
    %375 = vmatprep.subr.mxu0 0.0
    %376 = vmatpush1.xpose.msra.mxu0 %v29
    %377 = vmatprep.subr.mxu0 0.0
    %378 = vmatpush1.xpose.msra.mxu0 %v28
    %379 = vmatprep.subr.mxu0 0.0
    %380 = vmatpush1.xpose.msra.mxu0 %v27
    %381 = vmatprep.subr.mxu0 0.0
    %382 = vmatpush1.xpose.msra.mxu0 %v26
    %383 = vmatprep.subr.mxu0 0.0
    %384 = vmatpush1.xpose.msra.mxu0 %v25
    %385 = vmatprep.subr.mxu0 0.0
    %386 = vmatpush1.xpose.msra.mxu0 %v24
    %387 = vmatprep.subr.mxu0 0.0
    %388 = vmatpush1.xpose.msra.mxu0 %v23
    %389 = vmatprep.subr.mxu0 0.0
    %390 = vmatpush1.xpose.msra.mxu0 %v22
    %391 = vmatprep.subr.mxu0 0.0
    %392 = vmatpush1.xpose.msra.mxu0 %v21
    %393 = vmatprep.subr.mxu0 0.0
    %394 = vmatpush1.xpose.msra.mxu0 %v20
    %395 = vmatprep.subr.mxu0 0.0
    %396 = vmatpush1.xpose.msra.mxu0 %v19
    %397 = vmatprep.subr.mxu0 0.0
    %398 = vmatpush2.xpose.msra.mxu0 0.0
    %399 = vmatprep.subr.mxu0 0.0
    %400 = vmatpush2.xpose.msra.mxu0 0.0
    %401 = vmatprep.subr.mxu0 0.0
    %402 = vmatpush2.xpose.msra.mxu0 0.0
    %403 = vmatprep.subr.mxu0 0.0
    %404 = vmatpush2.xpose.msra.mxu0 0.0
    %405 = vmatprep.subr.mxu0 0.0
    %406 = vmatpush2.xpose.msra.mxu0 0.0
    %407 = vmatprep.subr.mxu0 0.0
    %408 = vmatpush2.xpose.msra.mxu0 0.0
    %409 = vmatprep.subr.mxu0 0.0
    %410 = vmatpush2.xpose.msra.mxu0 0.0
    %411 = vmatprep.subr.mxu0 0.0
    %412 = vmatpush2.xpose.msra.mxu0 0.0
    %413 = vmatprep.subr.mxu0 0.0
    %414 = vmatpush2.xpose.msra.mxu0 0.0
    %415 = vmatprep.subr.mxu0 0.0
    %416 = vmatpush2.xpose.msra.mxu0 0.0
    %417 = vmatprep.subr.mxu0 0.0
    %418 = vmatpush2.xpose.msra.mxu0 0.0
    %419 = vmatprep.subr.mxu0 0.0
    %420 = vmatpush2.xpose.msra.mxu0 0.0
    %421 = vmatprep.subr.mxu0 0.0
    %422 = vmatpush2.xpose.msra.mxu0 0.0
    %423 = vmatprep.subr.mxu0 0.0
    %424 = vmatpush2.xpose.msra.mxu0 0.0
    %425 = vmatprep.subr.mxu0 0.0
    %426 = vmatpush2.xpose.msra.mxu0 0.0
    %427 = vmatprep.subr.mxu0 0.0
    %428 = vmatpush2.xpose.msra.mxu0 0.0
    %429 = vmatprep.mubr.f32.mxu0 0.0
    %430 = vmatmul.mubr.f32.gmra.mxu0 %v361
    %v431 = vpop.f32.mrf.mxu0
    %v432 = vadd.f32 %v364, %v431
    %v433 = vpop.f32.mrf.mxu0
    %434 = vdwg.mxu0
    %v435 = vmul.f32 %v290, %v432
    %436 = vadd.xlane.f32.xlu0 %v435
    %v437 = vpop.xlane.xlu0 %436
    %v438 = vrot.slane %v437, 4
    %v439 = vadd.f32 %v437, %v438
    %v440 = vrot.slane %v439, 2
    %v441 = vadd.f32 %v439, %v440
    %v442 = vrot.slane %v441, 1
    %v443 = vadd.f32 %v441, %v442
    %v444 = vrcp.pop %v443
    %v445 = vmul.f32 %v291, %v444
    %v446 = vsel %vm293, %v445, 0.0
    %v447 = vmul.f32 %v446, %v290
    %v448 = vadd.f32 %v274, %v447
    %v449 = vmul.f32 %v446, %v432
    %v450 = vsub.f32 %v276, %v449
    %v451 = vmul.f32 %v450, %v450
    %452 = vadd.xlane.f32.xlu0 %v451
    %v453 = vpop.xlane.xlu0 %452
    %v454 = vrot.slane %v453, 4
    %v455 = vadd.f32 %v453, %v454
    %v456 = vrot.slane %v455, 2
    %v457 = vadd.f32 %v455, %v456
    %v458 = vrot.slane %v457, 1
    %v459 = vadd.f32 %v457, %v458
    %v460 = vrcp.pop %v291
    %v461 = vmul.f32 %v459, %v460
    %v462 = vsel %vm293, %v461, 0.0
    %v463 = vmul.f32 %v462, %v290
    %v464 = vadd.f32 %v450, %v463
    %v465 = vsel %vm293, %v459, %v291
    %v466 = vsel %vm293, %v445, %v292
    %vm467 = vcmp.gt.f32.partialorder %v466, 1e-06
    %468 = vmatprep.subr.mxu0 0.0
    %469 = vmatpush1.msra.mxu0 %v34
    %470 = vmatprep.subr.mxu0 0.0
    %471 = vmatpush1.msra.mxu0 %v33
    %472 = vmatprep.subr.mxu0 0.0
    %473 = vmatpush1.msra.mxu0 %v32
    %474 = vmatprep.subr.mxu0 0.0
    %475 = vmatpush1.msra.mxu0 %v31
    %476 = vmatprep.subr.mxu0 0.0
    %477 = vmatpush1.msra.mxu0 %v30
    %478 = vmatprep.subr.mxu0 0.0
    %479 = vmatpush1.msra.mxu0 %v29
    %480 = vmatprep.subr.mxu0 0.0
    %481 = vmatpush1.msra.mxu0 %v28
    %482 = vmatprep.subr.mxu0 0.0
    %483 = vmatpush1.msra.mxu0 %v27
    %484 = vmatprep.subr.mxu0 0.0
    %485 = vmatpush1.msra.mxu0 %v26
    %486 = vmatprep.subr.mxu0 0.0
    %487 = vmatpush1.msra.mxu0 %v25
    %488 = vmatprep.subr.mxu0 0.0
    %489 = vmatpush1.msra.mxu0 %v24
    %490 = vmatprep.subr.mxu0 0.0
    %491 = vmatpush1.msra.mxu0 %v23
    %492 = vmatprep.subr.mxu0 0.0
    %493 = vmatpush1.msra.mxu0 %v22
    %494 = vmatprep.subr.mxu0 0.0
    %495 = vmatpush1.msra.mxu0 %v21
    %496 = vmatprep.subr.mxu0 0.0
    %497 = vmatpush1.msra.mxu0 %v20
    %498 = vmatprep.subr.mxu0 0.0
    %499 = vmatpush1.msra.mxu0 %v19
    %500 = vmatprep.subr.mxu0 0.0
    %501 = vmatpush2.msra.mxu0 0.0
    %502 = vmatprep.subr.mxu0 0.0
    %503 = vmatpush2.msra.mxu0 0.0
    %504 = vmatprep.subr.mxu0 0.0
    %505 = vmatpush2.msra.mxu0 0.0
    %506 = vmatprep.subr.mxu0 0.0
    %507 = vmatpush2.msra.mxu0 0.0
    %508 = vmatprep.subr.mxu0 0.0
    %509 = vmatpush2.msra.mxu0 0.0
    %510 = vmatprep.subr.mxu0 0.0
    %511 = vmatpush2.msra.mxu0 0.0
    %512 = vmatprep.subr.mxu0 0.0
    %513 = vmatpush2.msra.mxu0 0.0
    %514 = vmatprep.subr.mxu0 0.0
    %515 = vmatpush2.msra.mxu0 0.0
    %516 = vmatprep.subr.mxu0 0.0
    %517 = vmatpush2.msra.mxu0 0.0
    %518 = vmatprep.subr.mxu0 0.0
    %519 = vmatpush2.msra.mxu0 0.0
    %520 = vmatprep.subr.mxu0 0.0
    %521 = vmatpush2.msra.mxu0 0.0
    %522 = vmatprep.subr.mxu0 0.0
    %523 = vmatpush2.msra.mxu0 0.0
    %524 = vmatprep.subr.mxu0 0.0
    %525 = vmatpush2.msra.mxu0 0.0
    %526 = vmatprep.subr.mxu0 0.0
    %527 = vmatpush2.msra.mxu0 0.0
    %528 = vmatprep.subr.mxu0 0.0
    %529 = vmatpush2.msra.mxu0 0.0
    %530 = vmatprep.subr.mxu0 0.0
    %531 = vmatpush2.msra.mxu0 0.0
    %532 = vmatprep.mubr.f32.mxu0 0.0
    %533 = vmatmul.mubr.f32.gmra.mxu0 %v464
    %v534 = vpop.f32.mrf.mxu0
    %v535 = vadd.f32 0.0, %v534
    %v536 = vpop.f32.mrf.mxu0
    %537 = vdwg.mxu0
    %v538 = vmul.f32 %v189, %v464
    %539 = vmatprep.subr.mxu0 0.0
    %540 = vmatpush1.xpose.msra.mxu0 %v34
    %541 = vmatprep.subr.mxu0 0.0
    %542 = vmatpush1.xpose.msra.mxu0 %v33
    %543 = vmatprep.subr.mxu0 0.0
    %544 = vmatpush1.xpose.msra.mxu0 %v32
    %545 = vmatprep.subr.mxu0 0.0
    %546 = vmatpush1.xpose.msra.mxu0 %v31
    %547 = vmatprep.subr.mxu0 0.0
    %548 = vmatpush1.xpose.msra.mxu0 %v30
    %549 = vmatprep.subr.mxu0 0.0
    %550 = vmatpush1.xpose.msra.mxu0 %v29
    %551 = vmatprep.subr.mxu0 0.0
    %552 = vmatpush1.xpose.msra.mxu0 %v28
    %553 = vmatprep.subr.mxu0 0.0
    %554 = vmatpush1.xpose.msra.mxu0 %v27
    %555 = vmatprep.subr.mxu0 0.0
    %556 = vmatpush1.xpose.msra.mxu0 %v26
    %557 = vmatprep.subr.mxu0 0.0
    %558 = vmatpush1.xpose.msra.mxu0 %v25
    %559 = vmatprep.subr.mxu0 0.0
    %560 = vmatpush1.xpose.msra.mxu0 %v24
    %561 = vmatprep.subr.mxu0 0.0
    %562 = vmatpush1.xpose.msra.mxu0 %v23
    %563 = vmatprep.subr.mxu0 0.0
    %564 = vmatpush1.xpose.msra.mxu0 %v22
    %565 = vmatprep.subr.mxu0 0.0
    %566 = vmatpush1.xpose.msra.mxu0 %v21
    %567 = vmatprep.subr.mxu0 0.0
    %568 = vmatpush1.xpose.msra.mxu0 %v20
    %569 = vmatprep.subr.mxu0 0.0
    %570 = vmatpush1.xpose.msra.mxu0 %v19
    %571 = vmatprep.subr.mxu0 0.0
    %572 = vmatpush2.xpose.msra.mxu0 0.0
    %573 = vmatprep.subr.mxu0 0.0
    %574 = vmatpush2.xpose.msra.mxu0 0.0
    %575 = vmatprep.subr.mxu0 0.0
    %576 = vmatpush2.xpose.msra.mxu0 0.0
    %577 = vmatprep.subr.mxu0 0.0
    %578 = vmatpush2.xpose.msra.mxu0 0.0
    %579 = vmatprep.subr.mxu0 0.0
    %580 = vmatpush2.xpose.msra.mxu0 0.0
    %581 = vmatprep.subr.mxu0 0.0
    %582 = vmatpush2.xpose.msra.mxu0 0.0
    %583 = vmatprep.subr.mxu0 0.0
    %584 = vmatpush2.xpose.msra.mxu0 0.0
    %585 = vmatprep.subr.mxu0 0.0
    %586 = vmatpush2.xpose.msra.mxu0 0.0
    %587 = vmatprep.subr.mxu0 0.0
    %588 = vmatpush2.xpose.msra.mxu0 0.0
    %589 = vmatprep.subr.mxu0 0.0
    %590 = vmatpush2.xpose.msra.mxu0 0.0
    %591 = vmatprep.subr.mxu0 0.0
    %592 = vmatpush2.xpose.msra.mxu0 0.0
    %593 = vmatprep.subr.mxu0 0.0
    %594 = vmatpush2.xpose.msra.mxu0 0.0
    %595 = vmatprep.subr.mxu0 0.0
    %596 = vmatpush2.xpose.msra.mxu0 0.0
    %597 = vmatprep.subr.mxu0 0.0
    %598 = vmatpush2.xpose.msra.mxu0 0.0
    %599 = vmatprep.subr.mxu0 0.0
    %600 = vmatpush2.xpose.msra.mxu0 0.0
    %601 = vmatprep.subr.mxu0 0.0
    %602 = vmatpush2.xpose.msra.mxu0 0.0
    %603 = vmatprep.mubr.f32.mxu0 0.0
    %604 = vmatmul.mubr.f32.gmra.mxu0 %v535
    %v605 = vpop.f32.mrf.mxu0
    %v606 = vadd.f32 %v538, %v605
    %v607 = vpop.f32.mrf.mxu0
    %608 = vdwg.mxu0
    %v609 = vmul.f32 %v464, %v606
    %610 = vadd.xlane.f32.xlu0 %v609
    %v611 = vpop.xlane.xlu0 %610
    %v612 = vrot.slane %v611, 4
    %v613 = vadd.f32 %v611, %v612
    %v614 = vrot.slane %v613, 2
    %v615 = vadd.f32 %v613, %v614
    %v616 = vrot.slane %v615, 1
    %v617 = vadd.f32 %v615, %v616
    %v618 = vrcp.pop %v617
    %v619 = vmul.f32 %v465, %v618
    %v620 = vsel %vm467, %v619, 0.0
    %v621 = vmul.f32 %v620, %v464
    %v622 = vadd.f32 %v448, %v621
    %v623 = vmul.f32 %v620, %v606
    %v624 = vsub.f32 %v450, %v623
    %v625 = vmul.f32 %v624, %v624
    %626 = vadd.xlane.f32.xlu0 %v625
    %v627 = vpop.xlane.xlu0 %626
    %v628 = vrot.slane %v627, 4
    %v629 = vadd.f32 %v627, %v628
    %v630 = vrot.slane %v629, 2
    %v631 = vadd.f32 %v629, %v630
    %v632 = vrot.slane %v631, 1
    %v633 = vadd.f32 %v631, %v632
    %v634 = vrcp.pop %v465
    %v635 = vmul.f32 %v633, %v634
    %v636 = vsel %vm467, %v635, 0.0
    %v637 = vmul.f32 %v636, %v464
    %v638 = vadd.f32 %v624, %v637
    %v639 = vsel %vm467, %v633, %v465
    %v640 = vsel %vm467, %v619, %v466
    %vm641 = vcmp.gt.f32.partialorder %v640, 1e-06
    %642 = vmatprep.subr.mxu0 0.0
    %643 = vmatpush1.msra.mxu0 %v34
    %644 = vmatprep.subr.mxu0 0.0
    %645 = vmatpush1.msra.mxu0 %v33
    %646 = vmatprep.subr.mxu0 0.0
    %647 = vmatpush1.msra.mxu0 %v32
    %648 = vmatprep.subr.mxu0 0.0
    %649 = vmatpush1.msra.mxu0 %v31
    %650 = vmatprep.subr.mxu0 0.0
    %651 = vmatpush1.msra.mxu0 %v30
    %652 = vmatprep.subr.mxu0 0.0
    %653 = vmatpush1.msra.mxu0 %v29
    %654 = vmatprep.subr.mxu0 0.0
    %655 = vmatpush1.msra.mxu0 %v28
    %656 = vmatprep.subr.mxu0 0.0
    %657 = vmatpush1.msra.mxu0 %v27
    %658 = vmatprep.subr.mxu0 0.0
    %659 = vmatpush1.msra.mxu0 %v26
    %660 = vmatprep.subr.mxu0 0.0
    %661 = vmatpush1.msra.mxu0 %v25
    %662 = vmatprep.subr.mxu0 0.0
    %663 = vmatpush1.msra.mxu0 %v24
    %664 = vmatprep.subr.mxu0 0.0
    %665 = vmatpush1.msra.mxu0 %v23
    %666 = vmatprep.subr.mxu0 0.0
    %667 = vmatpush1.msra.mxu0 %v22
    %668 = vmatprep.subr.mxu0 0.0
    %669 = vmatpush1.msra.mxu0 %v21
    %670 = vmatprep.subr.mxu0 0.0
    %671 = vmatpush1.msra.mxu0 %v20
    %672 = vmatprep.subr.mxu0 0.0
    %673 = vmatpush1.msra.mxu0 %v19
    %674 = vmatprep.subr.mxu0 0.0
    %675 = vmatpush2.msra.mxu0 0.0
    %676 = vmatprep.subr.mxu0 0.0
    %677 = vmatpush2.msra.mxu0 0.0
    %678 = vmatprep.subr.mxu0 0.0
    %679 = vmatpush2.msra.mxu0 0.0
    %680 = vmatprep.subr.mxu0 0.0
    %681 = vmatpush2.msra.mxu0 0.0
    %682 = vmatprep.subr.mxu0 0.0
    %683 = vmatpush2.msra.mxu0 0.0
    %684 = vmatprep.subr.mxu0 0.0
    %685 = vmatpush2.msra.mxu0 0.0
    %686 = vmatprep.subr.mxu0 0.0
    %687 = vmatpush2.msra.mxu0 0.0
    %688 = vmatprep.subr.mxu0 0.0
    %689 = vmatpush2.msra.mxu0 0.0
    %690 = vmatprep.subr.mxu0 0.0
    %691 = vmatpush2.msra.mxu0 0.0
    %692 = vmatprep.subr.mxu0 0.0
    %693 = vmatpush2.msra.mxu0 0.0
    %694 = vmatprep.subr.mxu0 0.0
    %695 = vmatpush2.msra.mxu0 0.0
    %696 = vmatprep.subr.mxu0 0.0
    %697 = vmatpush2.msra.mxu0 0.0
    %698 = vmatprep.subr.mxu0 0.0
    %699 = vmatpush2.msra.mxu0 0.0
    %700 = vmatprep.subr.mxu0 0.0
    %701 = vmatpush2.msra.mxu0 0.0
    %702 = vmatprep.subr.mxu0 0.0
    %703 = vmatpush2.msra.mxu0 0.0
    %704 = vmatprep.subr.mxu0 0.0
    %705 = vmatpush2.msra.mxu0 0.0
    %706 = vmatprep.mubr.f32.mxu0 0.0
    %707 = vmatmul.mubr.f32.gmra.mxu0 %v638
    %v708 = vpop.f32.mrf.mxu0
    %v709 = vadd.f32 0.0, %v708
    %v710 = vpop.f32.mrf.mxu0
    %711 = vdwg.mxu0
    %v712 = vmul.f32 %v189, %v638
    %713 = vmatprep.subr.mxu0 0.0
    %714 = vmatpush1.xpose.msra.mxu0 %v34
    %715 = vmatprep.subr.mxu0 0.0
    %716 = vmatpush1.xpose.msra.mxu0 %v33
    %717 = vmatprep.subr.mxu0 0.0
    %718 = vmatpush1.xpose.msra.mxu0 %v32
    %719 = vmatprep.subr.mxu0 0.0
    %720 = vmatpush1.xpose.msra.mxu0 %v31
    %721 = vmatprep.subr.mxu0 0.0
    %722 = vmatpush1.xpose.msra.mxu0 %v30
    %723 = vmatprep.subr.mxu0 0.0
    %724 = vmatpush1.xpose.msra.mxu0 %v29
    %725 = vmatprep.subr.mxu0 0.0
    %726 = vmatpush1.xpose.msra.mxu0 %v28
    %727 = vmatprep.subr.mxu0 0.0
    %728 = vmatpush1.xpose.msra.mxu0 %v27
    %729 = vmatprep.subr.mxu0 0.0
    %730 = vmatpush1.xpose.msra.mxu0 %v26
    %731 = vmatprep.subr.mxu0 0.0
    %732 = vmatpush1.xpose.msra.mxu0 %v25
    %733 = vmatprep.subr.mxu0 0.0
    %734 = vmatpush1.xpose.msra.mxu0 %v24
    %735 = vmatprep.subr.mxu0 0.0
    %736 = vmatpush1.xpose.msra.mxu0 %v23
    %737 = vmatprep.subr.mxu0 0.0
    %738 = vmatpush1.xpose.msra.mxu0 %v22
    %739 = vmatprep.subr.mxu0 0.0
    %740 = vmatpush1.xpose.msra.mxu0 %v21
    %741 = vmatprep.subr.mxu0 0.0
    %742 = vmatpush1.xpose.msra.mxu0 %v20
    %743 = vmatprep.subr.mxu0 0.0
    %744 = vmatpush1.xpose.msra.mxu0 %v19
    %745 = vmatprep.subr.mxu0 0.0
    %746 = vmatpush2.xpose.msra.mxu0 0.0
    %747 = vmatprep.subr.mxu0 0.0
    %748 = vmatpush2.xpose.msra.mxu0 0.0
    %749 = vmatprep.subr.mxu0 0.0
    %750 = vmatpush2.xpose.msra.mxu0 0.0
    %751 = vmatprep.subr.mxu0 0.0
    %752 = vmatpush2.xpose.msra.mxu0 0.0
    %753 = vmatprep.subr.mxu0 0.0
    %754 = vmatpush2.xpose.msra.mxu0 0.0
    %755 = vmatprep.subr.mxu0 0.0
    %756 = vmatpush2.xpose.msra.mxu0 0.0
    %757 = vmatprep.subr.mxu0 0.0
    %758 = vmatpush2.xpose.msra.mxu0 0.0
    %759 = vmatprep.subr.mxu0 0.0
    %760 = vmatpush2.xpose.msra.mxu0 0.0
    %761 = vmatprep.subr.mxu0 0.0
    %762 = vmatpush2.xpose.msra.mxu0 0.0
    %763 = vmatprep.subr.mxu0 0.0
    %764 = vmatpush2.xpose.msra.mxu0 0.0
    %765 = vmatprep.subr.mxu0 0.0
    %766 = vmatpush2.xpose.msra.mxu0 0.0
    %767 = vmatprep.subr.mxu0 0.0
    %768 = vmatpush2.xpose.msra.mxu0 0.0
    %769 = vmatprep.subr.mxu0 0.0
    %770 = vmatpush2.xpose.msra.mxu0 0.0
    %771 = vmatprep.subr.mxu0 0.0
    %772 = vmatpush2.xpose.msra.mxu0 0.0
    %773 = vmatprep.subr.mxu0 0.0
    %774 = vmatpush2.xpose.msra.mxu0 0.0
    %775 = vmatprep.subr.mxu0 0.0
    %776 = vmatpush2.xpose.msra.mxu0 0.0
    %777 = vmatprep.mubr.f32.mxu0 0.0
    %778 = vmatmul.mubr.f32.gmra.mxu0 %v709
    %v779 = vpop.f32.mrf.mxu0
    %v780 = vadd.f32 %v712, %v779
    %v781 = vpop.f32.mrf.mxu0
    %782 = vdwg.mxu0
    %v783 = vmul.f32 %v638, %v780
    %784 = vadd.xlane.f32.xlu0 %v783
    %v785 = vpop.xlane.xlu0 %784
    %v786 = vrot.slane %v785, 4
    %v787 = vadd.f32 %v785, %v786
    %v788 = vrot.slane %v787, 2
    %v789 = vadd.f32 %v787, %v788
    %v790 = vrot.slane %v789, 1
    %v791 = vadd.f32 %v789, %v790
    %v792 = vrcp.pop %v791
    %v793 = vmul.f32 %v639, %v792
    %v794 = vsel %vm641, %v793, 0.0
    %v795 = vmul.f32 %v794, %v638
    %v796 = vadd.f32 %v622, %v795
    %v797 = vmul.f32 %v794, %v780
    %v798 = vsub.f32 %v624, %v797
    %v799 = vmul.f32 %v798, %v798
    %800 = vadd.xlane.f32.xlu0 %v799
    %v801 = vpop.xlane.xlu0 %800
    %v802 = vrot.slane %v801, 4
    %v803 = vadd.f32 %v801, %v802
    %v804 = vrot.slane %v803, 2
    %v805 = vadd.f32 %v803, %v804
    %v806 = vrot.slane %v805, 1
    %v807 = vadd.f32 %v805, %v806
    %v808 = vrcp.pop %v639
    %v809 = vmul.f32 %v807, %v808
    %v810 = vsel %vm641, %v809, 0.0
    %v811 = vmul.f32 %v810, %v638
    %v812 = vadd.f32 %v798, %v811
    %v813 = vsel %vm641, %v807, %v639
    %v814 = vsel %vm641, %v793, %v640
    %vm815 = vcmp.gt.f32.partialorder %v814, 1e-06
    %816 = vmatprep.subr.mxu0 0.0
    %817 = vmatpush1.msra.mxu0 %v34
    %818 = vmatprep.subr.mxu0 0.0
    %819 = vmatpush1.msra.mxu0 %v33
    %820 = vmatprep.subr.mxu0 0.0
    %821 = vmatpush1.msra.mxu0 %v32
    %822 = vmatprep.subr.mxu0 0.0
    %823 = vmatpush1.msra.mxu0 %v31
    %824 = vmatprep.subr.mxu0 0.0
    %825 = vmatpush1.msra.mxu0 %v30
    %826 = vmatprep.subr.mxu0 0.0
    %827 = vmatpush1.msra.mxu0 %v29
    %828 = vmatprep.subr.mxu0 0.0
    %829 = vmatpush1.msra.mxu0 %v28
    %830 = vmatprep.subr.mxu0 0.0
    %831 = vmatpush1.msra.mxu0 %v27
    %832 = vmatprep.subr.mxu0 0.0
    %833 = vmatpush1.msra.mxu0 %v26
    %834 = vmatprep.subr.mxu0 0.0
    %835 = vmatpush1.msra.mxu0 %v25
    %836 = vmatprep.subr.mxu0 0.0
    %837 = vmatpush1.msra.mxu0 %v24
    %838 = vmatprep.subr.mxu0 0.0
    %839 = vmatpush1.msra.mxu0 %v23
    %840 = vmatprep.subr.mxu0 0.0
    %841 = vmatpush1.msra.mxu0 %v22
    %842 = vmatprep.subr.mxu0 0.0
    %843 = vmatpush1.msra.mxu0 %v21
    %844 = vmatprep.subr.mxu0 0.0
    %845 = vmatpush1.msra.mxu0 %v20
    %846 = vmatprep.subr.mxu0 0.0
    %847 = vmatpush1.msra.mxu0 %v19
    %848 = vmatprep.subr.mxu0 0.0
    %849 = vmatpush2.msra.mxu0 0.0
    %850 = vmatprep.subr.mxu0 0.0
    %851 = vmatpush2.msra.mxu0 0.0
    %852 = vmatprep.subr.mxu0 0.0
    %853 = vmatpush2.msra.mxu0 0.0
    %854 = vmatprep.subr.mxu0 0.0
    %855 = vmatpush2.msra.mxu0 0.0
    %856 = vmatprep.subr.mxu0 0.0
    %857 = vmatpush2.msra.mxu0 0.0
    %858 = vmatprep.subr.mxu0 0.0
    %859 = vmatpush2.msra.mxu0 0.0
    %860 = vmatprep.subr.mxu0 0.0
    %861 = vmatpush2.msra.mxu0 0.0
    %862 = vmatprep.subr.mxu0 0.0
    %863 = vmatpush2.msra.mxu0 0.0
    %864 = vmatprep.subr.mxu0 0.0
    %865 = vmatpush2.msra.mxu0 0.0
    %866 = vmatprep.subr.mxu0 0.0
    %867 = vmatpush2.msra.mxu0 0.0
    %868 = vmatprep.subr.mxu0 0.0
    %869 = vmatpush2.msra.mxu0 0.0
    %870 = vmatprep.subr.mxu0 0.0
    %871 = vmatpush2.msra.mxu0 0.0
    %872 = vmatprep.subr.mxu0 0.0
    %873 = vmatpush2.msra.mxu0 0.0
    %874 = vmatprep.subr.mxu0 0.0
    %875 = vmatpush2.msra.mxu0 0.0
    %876 = vmatprep.subr.mxu0 0.0
    %877 = vmatpush2.msra.mxu0 0.0
    %878 = vmatprep.subr.mxu0 0.0
    %879 = vmatpush2.msra.mxu0 0.0
    %880 = vmatprep.mubr.f32.mxu0 0.0
    %881 = vmatmul.mubr.f32.gmra.mxu0 %v812
    %v882 = vpop.f32.mrf.mxu0
    %v883 = vadd.f32 0.0, %v882
    %v884 = vpop.f32.mrf.mxu0
    %885 = vdwg.mxu0
    %v886 = vmul.f32 %v189, %v812
    %887 = vmatprep.subr.mxu0 0.0
    %888 = vmatpush1.xpose.msra.mxu0 %v34
    %889 = vmatprep.subr.mxu0 0.0
    %890 = vmatpush1.xpose.msra.mxu0 %v33
    %891 = vmatprep.subr.mxu0 0.0
    %892 = vmatpush1.xpose.msra.mxu0 %v32
    %893 = vmatprep.subr.mxu0 0.0
    %894 = vmatpush1.xpose.msra.mxu0 %v31
    %895 = vmatprep.subr.mxu0 0.0
    %896 = vmatpush1.xpose.msra.mxu0 %v30
    %897 = vmatprep.subr.mxu0 0.0
    %898 = vmatpush1.xpose.msra.mxu0 %v29
    %899 = vmatprep.subr.mxu0 0.0
    %900 = vmatpush1.xpose.msra.mxu0 %v28
    %901 = vmatprep.subr.mxu0 0.0
    %902 = vmatpush1.xpose.msra.mxu0 %v27
    %903 = vmatprep.subr.mxu0 0.0
    %904 = vmatpush1.xpose.msra.mxu0 %v26
    %905 = vmatprep.subr.mxu0 0.0
    %906 = vmatpush1.xpose.msra.mxu0 %v25
    %907 = vmatprep.subr.mxu0 0.0
    %908 = vmatpush1.xpose.msra.mxu0 %v24
    %909 = vmatprep.subr.mxu0 0.0
    %910 = vmatpush1.xpose.msra.mxu0 %v23
    %911 = vmatprep.subr.mxu0 0.0
    %912 = vmatpush1.xpose.msra.mxu0 %v22
    %913 = vmatprep.subr.mxu0 0.0
    %914 = vmatpush1.xpose.msra.mxu0 %v21
    %915 = vmatprep.subr.mxu0 0.0
    %916 = vmatpush1.xpose.msra.mxu0 %v20
    %917 = vmatprep.subr.mxu0 0.0
    %918 = vmatpush1.xpose.msra.mxu0 %v19
    %919 = vmatprep.subr.mxu0 0.0
    %920 = vmatpush2.xpose.msra.mxu0 0.0
    %921 = vmatprep.subr.mxu0 0.0
    %922 = vmatpush2.xpose.msra.mxu0 0.0
    %923 = vmatprep.subr.mxu0 0.0
    %924 = vmatpush2.xpose.msra.mxu0 0.0
    %925 = vmatprep.subr.mxu0 0.0
    %926 = vmatpush2.xpose.msra.mxu0 0.0
    %927 = vmatprep.subr.mxu0 0.0
    %928 = vmatpush2.xpose.msra.mxu0 0.0
    %929 = vmatprep.subr.mxu0 0.0
    %930 = vmatpush2.xpose.msra.mxu0 0.0
    %931 = vmatprep.subr.mxu0 0.0
    %932 = vmatpush2.xpose.msra.mxu0 0.0
    %933 = vmatprep.subr.mxu0 0.0
    %934 = vmatpush2.xpose.msra.mxu0 0.0
    %935 = vmatprep.subr.mxu0 0.0
    %936 = vmatpush2.xpose.msra.mxu0 0.0
    %937 = vmatprep.subr.mxu0 0.0
    %938 = vmatpush2.xpose.msra.mxu0 0.0
    %939 = vmatprep.subr.mxu0 0.0
    %940 = vmatpush2.xpose.msra.mxu0 0.0
    %941 = vmatprep.subr.mxu0 0.0
    %942 = vmatpush2.xpose.msra.mxu0 0.0
    %943 = vmatprep.subr.mxu0 0.0
    %944 = vmatpush2.xpose.msra.mxu0 0.0
    %945 = vmatprep.subr.mxu0 0.0
    %946 = vmatpush2.xpose.msra.mxu0 0.0
    %947 = vmatprep.subr.mxu0 0.0
    %948 = vmatpush2.xpose.msra.mxu0 0.0
    %949 = vmatprep.subr.mxu0 0.0
    %950 = vmatpush2.xpose.msra.mxu0 0.0
    %951 = vmatprep.mubr.f32.mxu0 0.0
    %952 = vmatmul.mubr.f32.gmra.mxu0 %v883
    %v953 = vpop.f32.mrf.mxu0
    %v954 = vadd.f32 %v886, %v953
    %v955 = vpop.f32.mrf.mxu0
    %956 = vdwg.mxu0
    %v957 = vmul.f32 %v812, %v954
    %958 = vadd.xlane.f32.xlu0 %v957
    %v959 = vpop.xlane.xlu0 %958
    %v960 = vrot.slane %v959, 4
    %v961 = vadd.f32 %v959, %v960
    %v962 = vrot.slane %v961, 2
    %v963 = vadd.f32 %v961, %v962
    %v964 = vrot.slane %v963, 1
    %v965 = vadd.f32 %v963, %v964
    %v966 = vrcp.pop %v965
    %v967 = vmul.f32 %v813, %v966
    %v968 = vsel %vm815, %v967, 0.0
    %v969 = vmul.f32 %v968, %v812
    %v970 = vadd.f32 %v796, %v969
    %971 = vmatprep.subr.mxu0 0.0
    %972 = vmatpush1.msra.mxu0 %v34
    %973 = vmatprep.subr.mxu0 0.0
    %974 = vmatpush1.msra.mxu0 %v33
    %975 = vmatprep.subr.mxu0 0.0
    %976 = vmatpush1.msra.mxu0 %v32
    %977 = vmatprep.subr.mxu0 0.0
    %978 = vmatpush1.msra.mxu0 %v31
    %979 = vmatprep.subr.mxu0 0.0
    %980 = vmatpush1.msra.mxu0 %v30
    %981 = vmatprep.subr.mxu0 0.0
    %982 = vmatpush1.msra.mxu0 %v29
    %983 = vmatprep.subr.mxu0 0.0
    %984 = vmatpush1.msra.mxu0 %v28
    %985 = vmatprep.subr.mxu0 0.0
    %986 = vmatpush1.msra.mxu0 %v27
    %987 = vmatprep.subr.mxu0 0.0
    %988 = vmatpush1.msra.mxu0 %v26
    %989 = vmatprep.subr.mxu0 0.0
    %990 = vmatpush1.msra.mxu0 %v25
    %991 = vmatprep.subr.mxu0 0.0
    %992 = vmatpush1.msra.mxu0 %v24
    %993 = vmatprep.subr.mxu0 0.0
    %994 = vmatpush1.msra.mxu0 %v23
    %995 = vmatprep.subr.mxu0 0.0
    %996 = vmatpush1.msra.mxu0 %v22
    %997 = vmatprep.subr.mxu0 0.0
    %998 = vmatpush1.msra.mxu0 %v21
    %999 = vmatprep.subr.mxu0 0.0
    %1000 = vmatpush1.msra.mxu0 %v20
    %1001 = vmatprep.subr.mxu0 0.0
    %1002 = vmatpush1.msra.mxu0 %v19
    %1003 = vmatprep.subr.mxu0 0.0
    %1004 = vmatpush2.msra.mxu0 0.0
    %1005 = vmatprep.subr.mxu0 0.0
    %1006 = vmatpush2.msra.mxu0 0.0
    %1007 = vmatprep.subr.mxu0 0.0
    %1008 = vmatpush2.msra.mxu0 0.0
    %1009 = vmatprep.subr.mxu0 0.0
    %1010 = vmatpush2.msra.mxu0 0.0
    %1011 = vmatprep.subr.mxu0 0.0
    %1012 = vmatpush2.msra.mxu0 0.0
    %1013 = vmatprep.subr.mxu0 0.0
    %1014 = vmatpush2.msra.mxu0 0.0
    %1015 = vmatprep.subr.mxu0 0.0
    %1016 = vmatpush2.msra.mxu0 0.0
    %1017 = vmatprep.subr.mxu0 0.0
    %1018 = vmatpush2.msra.mxu0 0.0
    %1019 = vmatprep.subr.mxu0 0.0
    %1020 = vmatpush2.msra.mxu0 0.0
    %1021 = vmatprep.subr.mxu0 0.0
    %1022 = vmatpush2.msra.mxu0 0.0
    %1023 = vmatprep.subr.mxu0 0.0
    %1024 = vmatpush2.msra.mxu0 0.0
    %1025 = vmatprep.subr.mxu0 0.0
    %1026 = vmatpush2.msra.mxu0 0.0
    %1027 = vmatprep.subr.mxu0 0.0
    %1028 = vmatpush2.msra.mxu0 0.0
    %1029 = vmatprep.subr.mxu0 0.0
    %1030 = vmatpush2.msra.mxu0 0.0
    %1031 = vmatprep.subr.mxu0 0.0
    %1032 = vmatpush2.msra.mxu0 0.0
    %1033 = vmatprep.subr.mxu0 0.0
    %1034 = vmatpush2.msra.mxu0 0.0
    %1035 = vmatprep.mubr.f32.mxu0 0.0
    %1036 = vmatmul.mubr.f32.gmra.mxu0 %v970
    %v1037 = vpop.f32.mrf.mxu0
    %v1038 = vadd.f32 0.0, %v1037
    %v1039 = vpop.f32.mrf.mxu0
    %1040 = vdwg.mxu0
    %v1041 = vadd.f32 %v37, %v1038
    %1042 = vst [vmem:[#allocation3] sm:$0xff] %v1041
    // Predicated region
    $region18: #{tikhonov_cg_forward.1} parent=1 // pred_check
      _
    $region19: #{tikhonov_cg_forward.1} parent=1 // pred_check_branch
      %1044 = sbr.rel (0) target = $region21
    $region20: #{tikhonov_cg_forward.1} parent=1 // pred_region
      %s1046 = ssub.s32 128, 128
      %1047 = vsyncadd [#allocation4], %s1046
      %s1049 = sshll.u32 [#allocation3], 4
      %s1050 = int_to_ptr.vmem [resolvable:$true] %s1049
      %1052 = dma.vmem_to_hbm [thread:$0]  %s1050, 128, %s4, [#allocation4]
    $region21: #{tikhonov_cg_forward.1} parent=1 // pred_fallthru
      _
    // Predicated region
    $region22: #{tikhonov_cg_forward.1} parent=1 // pred_check
      _
    $region23: #{tikhonov_cg_forward.1} parent=1 // pred_check_branch
      %1054 = sbr.rel (0) target = $region25
    $region24: #{tikhonov_cg_forward.1} parent=1 // pred_region
      %1055 = dma.done [#allocation4], 128
    $region25: #{tikhonov_cg_forward.1} parent=1 // pred_fallthru
      _
    %1056 = vsyncpa [#allocation4], 1

</llo_original>
